<compile_context>
chip_gen: v5e
topology: v5e:2x2
jax: 0.10.0
libtpu: 0.0.40
codegen_flags: <defaults>
</compile_context>

<pallas_src>
import jax
import jax.numpy as jnp
from jax.experimental import pallas as pl
from jax.experimental.pallas import tpu as pltpu

C_IN = 512        # fc input dim   (fixed by nn.Linear(512, 40))
C_OUT = 40        # fc output dim == event channel count (fixed by the module)
LANE = 128        # TPU lane width
MAX_T_HW = 16384  # max spatial tile (lanes); 40*16384*4B ~= 2.6 MiB per f32 block


# --------------------------------------------------------------------------- #
# Kernel 1: per-batch channel-attention vector (tiny, off the hot path).
# --------------------------------------------------------------------------- #
def _channel_att_fc_kernel(agg_ref, w1_ref, w2_ref, att_ref):
    # agg_ref : (1, L, 512)   one batch element of aggregrated_event[0]
    # w1_ref  : (512, 40)     Linear(512,40).weight.T
    # w2_ref  : (40, 40)      Linear(40,40).weight.T
    # att_ref : (1, 40, 1)    channel attention, channels on sublanes
    agg = agg_ref[0]                                           # (L, 512)
    # AdaptiveAvgPool2d(1) over the (L, 1) "spatial" dims == mean over L.
    pooled = jnp.mean(agg, axis=0, keepdims=True)              # (1, 512)
    h = jnp.dot(pooled, w1_ref[...],
                preferred_element_type=jnp.float32)            # (1, 40)
    h = jnp.maximum(h, 0.0)                                    # ReLU(inplace=True)
    att = jax.nn.sigmoid(
        jnp.dot(h, w2_ref[...],
                preferred_element_type=jnp.float32))           # (1, 40)
    # One small lane->sublane relayout per batch element (off the hot path).
    att_ref[...] = att.reshape(1, C_OUT, 1)


def channel_attention_vector(agg, w1, w2):
    """agg: (B, L, 512) -> attention (B, 40, 1) float32."""
    B, L, cin = agg.shape
    assert cin == C_IN
    return pl.pallas_call(
        _channel_att_fc_kernel,
        out_shape=jax.ShapeDtypeStruct((B, C_OUT, 1), jnp.float32),
        grid=(B,),
        in_specs=[
            pl.BlockSpec((1, L, C_IN), lambda b: (b, 0, 0)),
            pl.BlockSpec((C_IN, C_OUT), lambda b: (0, 0)),
            pl.BlockSpec((C_OUT, C_OUT), lambda b: (0, 0)),
        ],
        out_specs=pl.BlockSpec((1, C_OUT, 1), lambda b: (b, 0, 0)),
        compiler_params=pltpu.CompilerParams(
            dimension_semantics=("parallel",)),
    )(agg.astype(jnp.float32), w1, w2)


# --------------------------------------------------------------------------- #
# Kernel 2: HBM-bandwidth-bound broadcast multiply (the hot loop).
# --------------------------------------------------------------------------- #
def _channel_att_scale_kernel(att_ref, feat_ref, out_ref):
    # att_ref  : (1, 40, 1)     f32, channels on sublanes
    # feat_ref : (1, 40, t_hw)  spatial tile of event_40C_feature
    # out_ref  : (1, 40, t_hw)
    out_ref[...] = feat_ref[...] * att_ref[...].astype(feat_ref.dtype)


def channel_att(event_40C_feature, aggregrated_event, w1, w2,
                *, max_tile_hw=MAX_T_HW, donate_feature=False):
    """event_40C_feature: (B, 40, H, W); aggregrated_event: tuple, [0] is (B, L, 512)."""
    agg = aggregrated_event[0]
    B, C, H, W = event_40C_feature.shape
    assert C == C_OUT
    Ba, L, cin = agg.shape
    assert cin == C_IN and Ba == B

    # Attention vector, computed once per batch element (tiny).
    att = channel_attention_vector(agg, w1, w2)          # (B, 40, 1) f32

    HW = H * W
    feat = event_40C_feature.reshape(B, C, HW)
    dtype = feat.dtype

    # Spatial tile: whole extent if it fits, else the largest multiple of 128.
    # No wrapper-side padding/slicing -- Pallas masks the ragged edge block.
    if HW <= max_tile_hw:
        t_hw = HW
    else:
        t_hw = (max_tile_hw // LANE) * LANE
    n_hw = pl.cdiv(HW, t_hw)

    itemsize = jnp.dtype(dtype).itemsize
    cost = pl.CostEstimate(
        flops=B * C * HW,
        transcendentals=0,
        bytes_accessed=2 * B * C * HW * itemsize + B * C * 4,
    )

    out = pl.pallas_call(
        _channel_att_scale_kernel,
        out_shape=jax.ShapeDtypeStruct((B, C, HW), dtype),
        grid=(B, n_hw),
        in_specs=[
            # att: block index constant in s -> refetched only per batch element.
            pl.BlockSpec((1, C_OUT, 1), lambda b, s: (b, 0, 0)),
            pl.BlockSpec((1, C, t_hw), lambda b, s: (b, 0, s)),
        ],
        out_specs=pl.BlockSpec((1, C, t_hw), lambda b, s: (b, 0, s)),
        compiler_params=pltpu.CompilerParams(
            # No cross-iteration state -> both axes fully parallel
            # (megacore sharding on v7x even for B == 1).
            dimension_semantics=("parallel", "parallel"),
            vmem_limit_bytes=32 * 1024 * 1024,
        ),
        cost_estimate=cost,
        # Write in place when the caller donates the feature map.
        input_output_aliases={1: 0} if donate_feature else {},
    )(att, feat)

    return out.reshape(B, C, H, W)


# --------------------------------------------------------------------------- #
# Pure-JAX reference matching the PyTorch forward.
# --------------------------------------------------------------------------- #
def channel_att_ref(event_40C_feature, aggregrated_event, w1, w2):
    agg = aggregrated_event[0].astype(jnp.float32)       # (B, L, 512)
    pooled = jnp.mean(agg, axis=1)                       # (B, 512)
    h = jnp.maximum(pooled @ w1, 0.0)                    # (B, 40)
    att = jax.nn.sigmoid(h @ w2)                         # (B, 40)
    att = att[:, :, None, None].astype(event_40C_feature.dtype)
    return event_40C_feature * att


if __name__ == "__main__":
    key = jax.random.PRNGKey(0)
    (k_feat, k_agg, k_w1, k_w2,
     k_feat2, k_agg2, k_feat3) = jax.random.split(key, 7)

    # Shared weights (torch Linear weights, pre-transposed to (in, out)).
    w1 = jax.random.normal(k_w1, (C_IN, C_OUT), jnp.float32) * (1.0 / C_IN ** 0.5)
    w2 = jax.random.normal(k_w2, (C_OUT, C_OUT), jnp.float32) * (1.0 / C_OUT ** 0.5)

    # --- Test 1: lane-aligned spatial size, single tile per batch ------------
    B, L, H, W = 2, 8, 16, 16
    feat1 = jax.random.normal(k_feat, (B, C_OUT, H, W), jnp.float32)
    agg1 = (jax.random.normal(k_agg, (B, L, C_IN), jnp.float32),)
    out1 = jax.block_until_ready(channel_att(feat1, agg1, w1, w2))
    ref1 = channel_att_ref(feat1, agg1, w1, w2)
    assert out1.shape == feat1.shape
    assert jnp.allclose(out1, ref1, atol=1e-5, rtol=1e-5)

    # --- Test 2: unaligned spatial size + multiple spatial tiles per batch ---
    # (exercises Pallas' masked ragged edge block -- no wrapper pad/slice)
    B2, L2, H2, W2 = 2, 8, 20, 20
    feat2 = jax.random.normal(k_feat2, (B2, C_OUT, H2, W2), jnp.float32)
    agg2 = (jax.random.normal(k_agg2, (B2, L2, C_IN), jnp.float32),)
    out2 = jax.block_until_ready(
        channel_att(feat2, agg2, w1, w2, max_tile_hw=128))
    ref2 = channel_att_ref(feat2, agg2, w1, w2)
    assert out2.shape == feat2.shape
    assert jnp.allclose(out2, ref2, atol=1e-5, rtol=1e-5)

    # --- Test 3: bf16 streaming path (halves HBM traffic in the hot loop) ----
    feat3 = jax.random.normal(k_feat3, (B, C_OUT, H, W)).astype(jnp.bfloat16)
    out3 = jax.block_until_ready(channel_att(feat3, agg1, w1, w2))
    assert out3.dtype == jnp.bfloat16
    ref3 = channel_att_ref(feat3.astype(jnp.float32), agg1, w1, w2)
    assert jnp.allclose(out3.astype(jnp.float32), ref3, atol=3e-2, rtol=3e-2)

    print("KERNEL_OK")
</pallas_src>

<mosaic_0001>
module attributes {stable_mosaic.version = 11 : i64} {
  func.func @_channel_att_fc_kernel(%arg0: i32, %arg1: memref<1x8x512xf32, #tpu.memory_space<vmem>>, %arg2: memref<512x40xf32, #tpu.memory_space<vmem>>, %arg3: memref<40x40xf32, #tpu.memory_space<vmem>>, %arg4: memref<1x40x1xf32, #tpu.memory_space<vmem>>) attributes {dimension_semantics = [#tpu.dimension_semantics<parallel>], iteration_bounds = array<i64: 2>, scalar_prefetch = 0 : i64, scratch_operands = 0 : i64, tpu.core_type = #tpu.core_type<tc>, window_params = [{transform_indices = @transform_0, window_bounds = array<i64: 1, 8, 512>}, {pipeline_mode = #tpu.pipeline_mode<synchronous>, transform_indices = @transform_1, window_bounds = array<i64: 512, 40>}, {pipeline_mode = #tpu.pipeline_mode<synchronous>, transform_indices = @transform_2, window_bounds = array<i64: 40, 40>}, {transform_indices = @transform_3, window_bounds = array<i64: 1, 40, 1>}]} {
    %c0 = arith.constant 0 : index
    %c0_0 = arith.constant 0 : index
    %c0_1 = arith.constant 0 : index
    %0 = vector.load %arg1[%c0, %c0_0, %c0_1] : memref<1x8x512xf32, #tpu.memory_space<vmem>>, vector<1x8x512xf32>
    %1 = vector.shape_cast %0 : vector<1x8x512xf32> to vector<8x512xf32>
    %cst = arith.constant dense<0.000000e+00> : vector<512xf32>
    %2 = vector.multi_reduction <add>, %1, %cst [0] : vector<8x512xf32> to vector<512xf32>
    %3 = vector.shape_cast %2 : vector<512xf32> to vector<1x512xf32>
    %cst_2 = arith.constant 8.000000e+00 : f32
    %4 = vector.broadcast %cst_2 : f32 to vector<1x512xf32>
    %5 = arith.divf %3, %4 : vector<1x512xf32>
    %c0_3 = arith.constant 0 : index
    %c0_4 = arith.constant 0 : index
    %6 = vector.load %arg2[%c0_3, %c0_4] : memref<512x40xf32, #tpu.memory_space<vmem>>, vector<512x40xf32>
    %cst_5 = arith.constant dense<0.000000e+00> : vector<1x40xf32>
    %7 = tpu.matmul %5, %6, %cst_5 {dimension_numbers = #tpu.dot_dimension_numbers<[1], [0], [0], [1], [0, 0, 1, 1], [], []>} : vector<1x512xf32>, vector<512x40xf32>, vector<1x40xf32> -> vector<1x40xf32>
    %cst_6 = arith.constant 0.000000e+00 : f32
    %8 = vector.broadcast %cst_6 : f32 to vector<1x40xf32>
    %9 = arith.maximumf %7, %8 : vector<1x40xf32>
    %c0_7 = arith.constant 0 : index
    %c0_8 = arith.constant 0 : index
    %10 = vector.load %arg3[%c0_7, %c0_8] : memref<40x40xf32, #tpu.memory_space<vmem>>, vector<40x40xf32>
    %cst_9 = arith.constant dense<0.000000e+00> : vector<1x40xf32>
    %11 = tpu.matmul %9, %10, %cst_9 {dimension_numbers = #tpu.dot_dimension_numbers<[1], [0], [0], [1], [0, 0, 1, 1], [], []>} : vector<1x40xf32>, vector<40x40xf32>, vector<1x40xf32> -> vector<1x40xf32>
    %12 = arith.negf %11 : vector<1x40xf32>
    %13 = math.exp %12 : vector<1x40xf32>
    %cst_10 = arith.constant 1.000000e+00 : f32
    %14 = vector.broadcast %cst_10 : f32 to vector<1x40xf32>
    %15 = arith.addf %14, %13 : vector<1x40xf32>
    %16 = arith.divf %14, %15 : vector<1x40xf32>
    %17 = vector.shape_cast %16 : vector<1x40xf32> to vector<1x40x1xf32>
    %c0_11 = arith.constant 0 : index
    %c0_12 = arith.constant 0 : index
    %c0_13 = arith.constant 0 : index
    %18 = vector.load %arg4[%c0_11, %c0_12, %c0_13] : memref<1x40x1xf32, #tpu.memory_space<vmem>>, vector<1x40x1xf32>
    tpu.vector_store %arg4[%c0_11, %c0_12, %c0_13], %17 {strides = array<i32>} : memref<1x40x1xf32, #tpu.memory_space<vmem>>, vector<1x40x1xf32>,
    return
  }
  func.func @transform_0(%arg0: i32) -> (i32, i32, i32) {
    %c0_i32 = arith.constant 0 : i32
    %c0_i32_0 = arith.constant 0 : i32
    %c0_i32_1 = arith.constant 0 : i32
    return %arg0, %c0_i32, %c0_i32_0 : i32, i32, i32
  }
  func.func @transform_1(%arg0: i32) -> (i32, i32) {
    %c0_i32 = arith.constant 0 : i32
    %c0_i32_0 = arith.constant 0 : i32
    %c0_i32_1 = arith.constant 0 : i32
    return %c0_i32, %c0_i32_0 : i32, i32
  }
  func.func @transform_2(%arg0: i32) -> (i32, i32) {
    %c0_i32 = arith.constant 0 : i32
    %c0_i32_0 = arith.constant 0 : i32
    %c0_i32_1 = arith.constant 0 : i32
    return %c0_i32, %c0_i32_0 : i32, i32
  }
  func.func @transform_3(%arg0: i32) -> (i32, i32, i32) {
    %c0_i32 = arith.constant 0 : i32
    %c0_i32_0 = arith.constant 0 : i32
    %c0_i32_1 = arith.constant 0 : i32
    return %arg0, %c0_i32, %c0_i32_0 : i32, i32, i32
  }
}

</mosaic_0001>

<llo_original>
// kernel: tpu_custom_call.1
$region0: #{tpu_custom_call.1}
  #allocation0 [shape = 'u32[]', space=smem, size = 0x4, offset = 0x4, fixed_abs, tag = 'smem constant byte address 0x4 - core index']
  #allocation1 [shape = 'u32[72,128]{1,0:T(1,128)}', space=vmem, size = 0x9000, scoped, tag = 'internal scratch']
  %s0 = inlined_call_operand.vmem [shape: f32[2,8,512], index: 0, kind: input, shape index: {}]
  %s1 = inlined_call_operand.vmem [shape: f32[512,40], index: 1, kind: input, shape index: {}]
  %s2 = inlined_call_operand.vmem [shape: f32[40,40], index: 2, kind: input, shape index: {}]
  %s3 = inlined_call_operand.vmem [shape: f32[2,40,1], index: 3, kind: output, shape index: {}]
  %s4 = sld [smem:[#allocation0]]
  $region45: #{tpu_custom_call.1} parent=0
    _
  %s6 = ssub.s32 1, %s4
  %s7 = scalar_select 0, %s6, %s4
  loop: start=0, step=1, limit=4
  $region2: #{tpu_custom_call.1} parent=0 // loop_pre_header
    _
  $region3: #{tpu_custom_call.1} parent=0 // loop_header
    %s9 = sphi 0, %s13
    %p10 = scmp.ge.s32.totalorder %s9, 4
    %s19 = sphi 0, %s21
    %s22 = sphi 0, %s19
    %s23 = sphi 0, %s22
    %s39 = sphi 0, %s23
    %s43 = sphi 0, %s43
    %s45 = sphi 0, %s43
    %s46 = sphi 0, %s45
    %s60 = sphi 0, %s46
    %s64 = sphi 0, %s64
    %s66 = sphi 0, %s64
    %s67 = sphi 0, %s66
    %s81 = sphi 0, %s67
    %s87 = sphi 0, %s89
    %s90 = sphi 0, %s87
    %s91 = sphi 0, %s90
    %s107 = sphi 0, %s91
  $region4: #{tpu_custom_call.1} parent=0 // loop_header_branch
    %12 = sbr.rel (%p10) target = $region8
  $region5: #{tpu_custom_call.1} parent=0 // loop_body
    %s14 = ssub.s32 %s9, 1
    %s15 = ssub.s32 %s9, 2
    %s16 = sadd.s32 %s9, 1
    %s17 = ssub.s32 %s9, %s16
    %p18 = scmp.eq.s32.totalorder %s17, 0
    %s20 = sadd.s32 %s19, 1
    %s21 = scalar_select %p18, %s19, %s20
    %p24 = pneg %p18
    %p25 = scmp.eq.s32.totalorder %s9, 1
    %p26 = por %p24, %p25
    %p27 = scmp.ne.s32.totalorder %s19, %s22
    %p28 = scmp.eq.s32.totalorder %s9, 0
    %p29 = por %p27, %p28
    %p30 = scmp.ne.s32.totalorder %s19, %s22
    %p31 = scmp.eq.s32.totalorder %s14, 1
    %p32 = por %p30, %p31
    %p33 = scmp.ne.s32.totalorder %s22, %s23
    %p34 = scmp.eq.s32.totalorder %s14, 0
    %p35 = por %p33, %p34
    %p36 = scmp.ne.s32.totalorder %s22, %s23
    %p37 = scmp.eq.s32.totalorder %s15, 1
    %p38 = por %p36, %p37
    %p40 = scmp.ne.s32.totalorder %s23, %s39
    %p41 = scmp.eq.s32.totalorder %s15, 0
    %p42 = por %p40, %p41
    %s44 = sadd.s32 %s43, 1
    %p47 = scmp.eq.s32.totalorder %s9, 1
    %p48 = scmp.ne.s32.totalorder %s43, %s45
    %p49 = scmp.eq.s32.totalorder %s9, 0
    %p50 = por %p48, %p49
    %p51 = scmp.ne.s32.totalorder %s43, %s45
    %p52 = scmp.eq.s32.totalorder %s14, 1
    %p53 = por %p51, %p52
    %p54 = scmp.ne.s32.totalorder %s45, %s46
    %p55 = scmp.eq.s32.totalorder %s14, 0
    %p56 = por %p54, %p55
    %p57 = scmp.ne.s32.totalorder %s45, %s46
    %p58 = scmp.eq.s32.totalorder %s15, 1
    %p59 = por %p57, %p58
    %p61 = scmp.ne.s32.totalorder %s46, %s60
    %p62 = scmp.eq.s32.totalorder %s15, 0
    %p63 = por %p61, %p62
    %s65 = sadd.s32 %s64, 1
    %p68 = scmp.eq.s32.totalorder %s9, 1
    %p69 = scmp.ne.s32.totalorder %s64, %s66
    %p70 = scmp.eq.s32.totalorder %s9, 0
    %p71 = por %p69, %p70
    %p72 = scmp.ne.s32.totalorder %s64, %s66
    %p73 = scmp.eq.s32.totalorder %s14, 1
    %p74 = por %p72, %p73
    %p75 = scmp.ne.s32.totalorder %s66, %s67
    %p76 = scmp.eq.s32.totalorder %s14, 0
    %p77 = por %p75, %p76
    %p78 = scmp.ne.s32.totalorder %s66, %s67
    %p79 = scmp.eq.s32.totalorder %s15, 1
    %p80 = por %p78, %p79
    %p82 = scmp.ne.s32.totalorder %s67, %s81
    %p83 = scmp.eq.s32.totalorder %s15, 0
    %p84 = por %p82, %p83
    %s85 = ssub.s32 %s9, %s16
    %p86 = scmp.eq.s32.totalorder %s85, 0
    %s88 = sadd.s32 %s87, 1
    %s89 = scalar_select %p86, %s87, %s88
    %p92 = pneg %p86
    %p93 = scmp.eq.s32.totalorder %s9, 1
    %p94 = por %p92, %p93
    %p95 = scmp.ne.s32.totalorder %s87, %s90
    %p96 = scmp.eq.s32.totalorder %s9, 0
    %p97 = por %p95, %p96
    %p98 = scmp.ne.s32.totalorder %s87, %s90
    %p99 = scmp.eq.s32.totalorder %s14, 1
    %p100 = por %p98, %p99
    %p101 = scmp.ne.s32.totalorder %s90, %s91
    %p102 = scmp.eq.s32.totalorder %s14, 0
    %p103 = por %p101, %p102
    %p104 = scmp.ne.s32.totalorder %s90, %s91
    %p105 = scmp.eq.s32.totalorder %s15, 1
    %p106 = por %p104, %p105
    %p108 = scmp.ne.s32.totalorder %s91, %s107
    %p109 = scmp.eq.s32.totalorder %s15, 0
    %p110 = por %p108, %p109
    %p111 = scmp.le.s32.totalorder 1, %s9
    %p112 = scmp.lt.s32.totalorder %s9, 3
    %p113 = pnand %p111, %p112
    %p114 = pneg %p113
    // Predicated region
    $region9: #{tpu_custom_call.1} parent=5 // pred_check
      _
    $region10: #{tpu_custom_call.1} parent=5 // pred_check_branch
      %116 = sbr.rel (%p113) target = $region12
    $region11: #{tpu_custom_call.1} parent=5 // pred_region
      %s117 = ssub.s32 %s9, 1
      // Predicated region
      $region13: #{tpu_custom_call.1} parent=11 // pred_check
        %p118 = pneg %p56
      $region14: #{tpu_custom_call.1} parent=11 // pred_check_branch
        %120 = sbr.rel (%p118) target = $region16
      $region15: #{tpu_custom_call.1} parent=11 // pred_region
        _
      $region16: #{tpu_custom_call.1} parent=11 // pred_fallthru
        _
      // Predicated region
      $region17: #{tpu_custom_call.1} parent=11 // pred_check
        %p121 = pneg %p77
      $region18: #{tpu_custom_call.1} parent=11 // pred_check_branch
        %123 = sbr.rel (%p121) target = $region20
      $region19: #{tpu_custom_call.1} parent=11 // pred_region
        _
      $region20: #{tpu_custom_call.1} parent=11 // pred_fallthru
        _
    $region12: #{tpu_custom_call.1} parent=5 // pred_fallthru
      _
    %p124 = scmp.lt.s32.totalorder %s9, 2
    // Predicated region
    $region21: #{tpu_custom_call.1} parent=5 // pred_check
      %p125 = pneg %p124
    $region22: #{tpu_custom_call.1} parent=5 // pred_check_branch
      %127 = sbr.rel (%p125) target = $region24
    $region23: #{tpu_custom_call.1} parent=5 // pred_region
      // Predicated region
      $region25: #{tpu_custom_call.1} parent=23 // pred_check
        %p128 = pneg %p29
      $region26: #{tpu_custom_call.1} parent=23 // pred_check_branch
        %130 = sbr.rel (%p128) target = $region28
      $region27: #{tpu_custom_call.1} parent=23 // pred_region
        %p131 = scmp.lt.s32.totalorder %s9, 1
        %s132 = scalar_select %p131, %s9, 1
        %s133 = smul.addr %s132, 4
        %s134 = smul.addr %s133, 8
        %s135 = scalar_lea.vmem %s0, %s134
      $region28: #{tpu_custom_call.1} parent=23 // pred_fallthru
        _
    $region24: #{tpu_custom_call.1} parent=5 // pred_fallthru
      _
    %p136 = scmp.le.s32.totalorder 1, %s9
    %p137 = scmp.lt.s32.totalorder %s9, 3
    %p138 = pnand %p136, %p137
    %p139 = pneg %p138
    // Predicated region
    $region29: #{tpu_custom_call.1} parent=5 // pred_check
      _
    $region30: #{tpu_custom_call.1} parent=5 // pred_check_branch
      %141 = sbr.rel (%p138) target = $region32
    $region31: #{tpu_custom_call.1} parent=5 // pred_region
      %s142 = ssub.s32 %s9, 1
      %p143 = scmp.lt.s32.totalorder %s14, 1
      %s144 = scalar_select %p143, %s14, 1
      %s145 = smul.addr %s144, 4
      %s146 = smul.addr %s145, 8
      %s147 = scalar_lea.vmem %s0, %s146
      %p148 = pneg %p35
      %p149 = pneg %p32
      %p150 = pneg %p56
      %p151 = pneg %p53
      %p152 = pneg %p77
      %p153 = pneg %p74
      %p154 = pneg %p103
      %p155 = pneg %p100
      %p156 = scmp.lt.s32.totalorder %s14, 1
      %s157 = scalar_select %p156, %s14, 1
      %s158 = smul.addr %s157, 5
      %s159 = smul.addr %s158, 8
      %s160 = scalar_lea.vmem %s3, %s159
      %p161 = scmp.lt.s32.totalorder %s14, 1
      %s162 = scalar_select %p161, %s14, 1
      %s163 = smul.addr %s162, 4
      %s164 = smul.addr %s163, 8
      %s165 = scalar_lea.vmem %s0, %s164
      %p166 = scmp.lt.s32.totalorder %s14, 1
      %s167 = scalar_select %p166, %s14, 1
      %s168 = smul.addr %s167, 5
      %s169 = smul.addr %s168, 8
      %s170 = scalar_lea.vmem %s3, %s169
      %v171 = vld [vmem:[%s165] sm:$0xff]
      %v172 = vld [vmem:[%s165 + $0x8] sm:$0xff]
      %v173 = vld [vmem:[%s165 + $0x10] sm:$0xff]
      %v174 = vld [vmem:[%s165 + $0x18] sm:$0xff]
      %v175 = vrot.slane %v171, 4
      %v176 = vadd.f32 %v171, %v175
      %v177 = vrot.slane %v176, 2
      %v178 = vadd.f32 %v176, %v177
      %v179 = vrot.slane %v178, 1
      %v180 = vadd.f32 %v178, %v179
      %v181 = vrot.slane %v172, 4
      %v182 = vadd.f32 %v172, %v181
      %v183 = vrot.slane %v182, 2
      %v184 = vadd.f32 %v182, %v183
      %v185 = vrot.slane %v184, 1
      %v186 = vadd.f32 %v184, %v185
      %v187 = vrot.slane %v173, 4
      %v188 = vadd.f32 %v173, %v187
      %v189 = vrot.slane %v188, 2
      %v190 = vadd.f32 %v188, %v189
      %v191 = vrot.slane %v190, 1
      %v192 = vadd.f32 %v190, %v191
      %v193 = vrot.slane %v174, 4
      %v194 = vadd.f32 %v174, %v193
      %v195 = vrot.slane %v194, 2
      %v196 = vadd.f32 %v194, %v195
      %v197 = vrot.slane %v196, 1
      %v198 = vadd.f32 %v196, %v197
      %v199 = vrcp.pop 8.0
      %v200 = vmul.f32 8.0, %v199
      %v201 = vsub.f32 1.0, %v200
      %v202 = vmul.f32 %v199, %v201
      %v203 = vadd.f32 %v199, %v202
      %vm204 = vweird.f32 %v199
      %v205 = vsel %vm204, %v199, %v203
      %v206 = vmul.f32 %v180, %v205
      %v207 = vmul.f32 %v186, %v205
      %v208 = vmul.f32 %v192, %v205
      %v209 = vmul.f32 %v198, %v205
      %v210 = vld [vmem:[%s1] sm:$0xff]
      %v211 = vld [vmem:[%s1 + $0x8] sm:$0xff]
      %v212 = vld [vmem:[%s1 + $0x10] sm:$0xff]
      %v213 = vld [vmem:[%s1 + $0x18] sm:$0xff]
      %v214 = vld [vmem:[%s1 + $0x20] sm:$0xff]
      %v215 = vld [vmem:[%s1 + $0x28] sm:$0xff]
      %v216 = vld [vmem:[%s1 + $0x30] sm:$0xff]
      %v217 = vld [vmem:[%s1 + $0x38] sm:$0xff]
      %v218 = vld [vmem:[%s1 + $0x40] sm:$0xff]
      %v219 = vld [vmem:[%s1 + $0x48] sm:$0xff]
      %v220 = vld [vmem:[%s1 + $0x50] sm:$0xff]
      %v221 = vld [vmem:[%s1 + $0x58] sm:$0xff]
      %v222 = vld [vmem:[%s1 + $0x60] sm:$0xff]
      %v223 = vld [vmem:[%s1 + $0x68] sm:$0xff]
      %v224 = vld [vmem:[%s1 + $0x70] sm:$0xff]
      %v225 = vld [vmem:[%s1 + $0x78] sm:$0xff]
      %v226 = vld [vmem:[%s1 + $0x80] sm:$0xff]
      %v227 = vld [vmem:[%s1 + $0x88] sm:$0xff]
      %v228 = vld [vmem:[%s1 + $0x90] sm:$0xff]
      %v229 = vld [vmem:[%s1 + $0x98] sm:$0xff]
      %v230 = vld [vmem:[%s1 + $0xa0] sm:$0xff]
      %v231 = vld [vmem:[%s1 + $0xa8] sm:$0xff]
      %v232 = vld [vmem:[%s1 + $0xb0] sm:$0xff]
      %v233 = vld [vmem:[%s1 + $0xb8] sm:$0xff]
      %v234 = vld [vmem:[%s1 + $0xc0] sm:$0xff]
      %v235 = vld [vmem:[%s1 + $0xc8] sm:$0xff]
      %v236 = vld [vmem:[%s1 + $0xd0] sm:$0xff]
      %v237 = vld [vmem:[%s1 + $0xd8] sm:$0xff]
      %v238 = vld [vmem:[%s1 + $0xe0] sm:$0xff]
      %v239 = vld [vmem:[%s1 + $0xe8] sm:$0xff]
      %v240 = vld [vmem:[%s1 + $0xf0] sm:$0xff]
      %v241 = vld [vmem:[%s1 + $0xf8] sm:$0xff]
      %v242 = vld [vmem:[%s1 + $0x100] sm:$0xff]
      %v243 = vld [vmem:[%s1 + $0x108] sm:$0xff]
      %v244 = vld [vmem:[%s1 + $0x110] sm:$0xff]
      %v245 = vld [vmem:[%s1 + $0x118] sm:$0xff]
      %v246 = vld [vmem:[%s1 + $0x120] sm:$0xff]
      %v247 = vld [vmem:[%s1 + $0x128] sm:$0xff]
      %v248 = vld [vmem:[%s1 + $0x130] sm:$0xff]
      %v249 = vld [vmem:[%s1 + $0x138] sm:$0xff]
      %v250 = vld [vmem:[%s1 + $0x140] sm:$0xff]
      %v251 = vld [vmem:[%s1 + $0x148] sm:$0xff]
      %v252 = vld [vmem:[%s1 + $0x150] sm:$0xff]
      %v253 = vld [vmem:[%s1 + $0x158] sm:$0xff]
      %v254 = vld [vmem:[%s1 + $0x160] sm:$0xff]
      %v255 = vld [vmem:[%s1 + $0x168] sm:$0xff]
      %v256 = vld [vmem:[%s1 + $0x170] sm:$0xff]
      %v257 = vld [vmem:[%s1 + $0x178] sm:$0xff]
      %v258 = vld [vmem:[%s1 + $0x180] sm:$0xff]
      %v259 = vld [vmem:[%s1 + $0x188] sm:$0xff]
      %v260 = vld [vmem:[%s1 + $0x190] sm:$0xff]
      %v261 = vld [vmem:[%s1 + $0x198] sm:$0xff]
      %v262 = vld [vmem:[%s1 + $0x1a0] sm:$0xff]
      %v263 = vld [vmem:[%s1 + $0x1a8] sm:$0xff]
      %v264 = vld [vmem:[%s1 + $0x1b0] sm:$0xff]
      %v265 = vld [vmem:[%s1 + $0x1b8] sm:$0xff]
      %v266 = vld [vmem:[%s1 + $0x1c0] sm:$0xff]
      %v267 = vld [vmem:[%s1 + $0x1c8] sm:$0xff]
      %v268 = vld [vmem:[%s1 + $0x1d0] sm:$0xff]
      %v269 = vld [vmem:[%s1 + $0x1d8] sm:$0xff]
      %v270 = vld [vmem:[%s1 + $0x1e0] sm:$0xff]
      %v271 = vld [vmem:[%s1 + $0x1e8] sm:$0xff]
      %v272 = vld [vmem:[%s1 + $0x1f0] sm:$0xff]
      %v273 = vld [vmem:[%s1 + $0x1f8] sm:$0xff]
      %274 = vmatpush.msra.mxu0 %v225
      %275 = vmatpush.msra.mxu0 %v224
      %276 = vmatpush.msra.mxu0 %v223
      %277 = vmatpush.msra.mxu0 %v222
      %278 = vmatpush.msra.mxu0 %v221
      %279 = vmatpush.msra.mxu0 %v220
      %280 = vmatpush.msra.mxu0 %v219
      %281 = vmatpush.msra.mxu0 %v218
      %282 = vmatpush.msra.mxu0 %v217
      %283 = vmatpush.msra.mxu0 %v216
      %284 = vmatpush.msra.mxu0 %v215
      %285 = vmatpush.msra.mxu0 %v214
      %286 = vmatpush.msra.mxu0 %v213
      %287 = vmatpush.msra.mxu0 %v212
      %288 = vmatpush.msra.mxu0 %v211
      %289 = vmatpush.msra.mxu0 %v210
      %290 = vmatmul.f32.gmra.mxu0 %v206
      %v291 = vpop.f32.mrf.mxu0
      %v292 = vadd.f32 0.0, %v291
      %293 = vdwg.mxu0
      %294 = vmatpush.msra.mxu0 %v241
      %295 = vmatpush.msra.mxu0 %v240
      %296 = vmatpush.msra.mxu0 %v239
      %297 = vmatpush.msra.mxu0 %v238
      %298 = vmatpush.msra.mxu0 %v237
      %299 = vmatpush.msra.mxu0 %v236
      %300 = vmatpush.msra.mxu0 %v235
      %301 = vmatpush.msra.mxu0 %v234
      %302 = vmatpush.msra.mxu0 %v233
      %303 = vmatpush.msra.mxu0 %v232
      %304 = vmatpush.msra.mxu0 %v231
      %305 = vmatpush.msra.mxu0 %v230
      %306 = vmatpush.msra.mxu0 %v229
      %307 = vmatpush.msra.mxu0 %v228
      %308 = vmatpush.msra.mxu0 %v227
      %309 = vmatpush.msra.mxu0 %v226
      %310 = vmatmul.f32.gmra.mxu0 %v207
      %v311 = vpop.f32.mrf.mxu0
      %v312 = vadd.f32 %v292, %v311
      %313 = vdwg.mxu0
      %314 = vmatpush.msra.mxu0 %v257
      %315 = vmatpush.msra.mxu0 %v256
      %316 = vmatpush.msra.mxu0 %v255
      %317 = vmatpush.msra.mxu0 %v254
      %318 = vmatpush.msra.mxu0 %v253
      %319 = vmatpush.msra.mxu0 %v252
      %320 = vmatpush.msra.mxu0 %v251
      %321 = vmatpush.msra.mxu0 %v250
      %322 = vmatpush.msra.mxu0 %v249
      %323 = vmatpush.msra.mxu0 %v248
      %324 = vmatpush.msra.mxu0 %v247
      %325 = vmatpush.msra.mxu0 %v246
      %326 = vmatpush.msra.mxu0 %v245
      %327 = vmatpush.msra.mxu0 %v244
      %328 = vmatpush.msra.mxu0 %v243
      %329 = vmatpush.msra.mxu0 %v242
      %330 = vmatmul.f32.gmra.mxu0 %v208
      %v331 = vpop.f32.mrf.mxu0
      %v332 = vadd.f32 %v312, %v331
      %333 = vdwg.mxu0
      %334 = vmatpush.msra.mxu0 %v273
      %335 = vmatpush.msra.mxu0 %v272
      %336 = vmatpush.msra.mxu0 %v271
      %337 = vmatpush.msra.mxu0 %v270
      %338 = vmatpush.msra.mxu0 %v269
      %339 = vmatpush.msra.mxu0 %v268
      %340 = vmatpush.msra.mxu0 %v267
      %341 = vmatpush.msra.mxu0 %v266
      %342 = vmatpush.msra.mxu0 %v265
      %343 = vmatpush.msra.mxu0 %v264
      %344 = vmatpush.msra.mxu0 %v263
      %345 = vmatpush.msra.mxu0 %v262
      %346 = vmatpush.msra.mxu0 %v261
      %347 = vmatpush.msra.mxu0 %v260
      %348 = vmatpush.msra.mxu0 %v259
      %349 = vmatpush.msra.mxu0 %v258
      %350 = vmatmul.f32.gmra.mxu0 %v209
      %v351 = vpop.f32.mrf.mxu0
      %v352 = vadd.f32 %v332, %v351
      %353 = vdwg.mxu0
      %v354 = vmax.f32 %v352, 0.0
      %v355 = vld [vmem:[%s2] sm:$0xff]
      %v356 = vld [vmem:[%s2 + $0x8] sm:$0xff]
      %v357 = vld [vmem:[%s2 + $0x10] sm:$0xff]
      %v358 = vld [vmem:[%s2 + $0x18] sm:$0xff]
      %v359 = vld [vmem:[%s2 + $0x20] sm:$0xff]
      %vm360 = vcmask 326656
      %v362 = vsel %vm360, %v354, 0
      %364 = vmatpush.msra.mxu0 0.0
      %365 = vmatpush.msra.mxu0 0.0
      %366 = vmatpush.msra.mxu0 0.0
      %367 = vmatpush.msra.mxu0 0.0
      %368 = vmatpush.msra.mxu0 0.0
      %369 = vmatpush.msra.mxu0 0.0
      %370 = vmatpush.msra.mxu0 0.0
      %371 = vmatpush.msra.mxu0 0.0
      %372 = vmatpush.msra.mxu0 0.0
      %373 = vmatpush.msra.mxu0 0.0
      %374 = vmatpush.msra.mxu0 0.0
      %375 = vmatpush.msra.mxu0 %v359
      %376 = vmatpush.msra.mxu0 %v358
      %377 = vmatpush.msra.mxu0 %v357
      %378 = vmatpush.msra.mxu0 %v356
      %379 = vmatpush.msra.mxu0 %v355
      %380 = vmatmul.f32.gmra.mxu0 %v362
      %v381 = vpop.f32.mrf.mxu0
      %v382 = vadd.f32 0.0, %v381
      %383 = vdwg.mxu0
      %v384 = vxor.u32 %v382, 2147483648
      %v385 = vmul.f32 %v384, 1.442695
      %v386 = vpow.pop %v385
      %v387 = vadd.f32 %v386, 1.0
      %v388 = vrcp.pop %v387
      %v389 = vmul.f32 %v387, %v388
      %v390 = vsub.f32 1.0, %v389
      %v391 = vmul.f32 %v388, %v390
      %v392 = vadd.f32 %v388, %v391
      %vm393 = vweird.f32 %v387
      %vm394 = vweird.f32 %v388
      %vm395 = vmor %vm393, %vm394
      %v396 = vsel %vm395, %v388, %v392
      %v397 = vand.u32 2147483647, %v387
      %vm398 = vcmp.eq.f32.partialorder %v397, 8.507059e+37
      %v399 = vand.u32 %v387, 2147483648
      %v400 = vor.u32 1.1754944e-38, %v399
      %v401 = vsel %vm398, %v400, %v396
      %v402 = vmul.f32 1.0, %v401
      %v403 = vperm.slane %v402, 0
      %v404 = vlaneseq
      %v405 = vshrl.u32 %v404, 7
      %407 = vset.pattern.permute.xlu0 %v405
      %408 = vperm.xlu0 %407, %v403
      %v409 = vpop.permute.xlu0 %408
      %v410 = vlaneseq
      %v411 = vshrl.u32 %v410, 7
      %v412 = vadd.s32 %v411, 8
      %413 = vset.pattern.permute.xlu0 %v412
      %414 = vperm.xlu0 %413, %v403
      %v415 = vpop.permute.xlu0 %414
      %v416 = vlaneseq
      %v417 = vshrl.u32 %v416, 7
      %v418 = vadd.s32 %v417, 16
      %419 = vset.pattern.permute.xlu0 %v418
      %420 = vperm.xlu0 %419, %v403
      %v421 = vpop.permute.xlu0 %420
      %v422 = vlaneseq
      %v423 = vshrl.u32 %v422, 7
      %v424 = vadd.s32 %v423, 24
      %425 = vset.pattern.permute.xlu0 %v424
      %426 = vperm.xlu0 %425, %v403
      %v427 = vpop.permute.xlu0 %426
      %v428 = vlaneseq
      %v429 = vshrl.u32 %v428, 7
      %v430 = vadd.s32 %v429, 32
      %431 = vset.pattern.permute.xlu0 %v430
      %432 = vperm.xlu0 %431, %v403
      %v433 = vpop.permute.xlu0 %432
      %vm434 = vcmask 7168
      %435 = vst.msk [vmem:[%s170] sm:$0xff] %vm434, %v409
      %436 = vst.msk [vmem:[%s170 + $0x8] sm:$0xff] %vm434, %v415
      %437 = vst.msk [vmem:[%s170 + $0x10] sm:$0xff] %vm434, %v421
      %438 = vst.msk [vmem:[%s170 + $0x18] sm:$0xff] %vm434, %v427
      %439 = vst.msk [vmem:[%s170 + $0x20] sm:$0xff] %vm434, %v433
      %p440 = scmp.lt.s32.totalorder %s14, 1
      %s441 = scalar_select %p440, %s14, 1
      %s442 = smul.addr %s441, 5
      %s443 = smul.addr %s442, 8
      %s444 = scalar_lea.vmem %s3, %s443
      // Predicated region
      $region33: #{tpu_custom_call.1} parent=31 // pred_check
        %p445 = pneg %p100
      $region34: #{tpu_custom_call.1} parent=31 // pred_check_branch
        %447 = sbr.rel (%p445) target = $region36
      $region35: #{tpu_custom_call.1} parent=31 // pred_region
        _
      $region36: #{tpu_custom_call.1} parent=31 // pred_fallthru
        _
    $region32: #{tpu_custom_call.1} parent=5 // pred_fallthru
      _
    %p448 = scmp.le.s32.totalorder 2, %s9
    // Predicated region
    $region37: #{tpu_custom_call.1} parent=5 // pred_check
      %p449 = pneg %p448
    $region38: #{tpu_custom_call.1} parent=5 // pred_check_branch
      %451 = sbr.rel (%p449) target = $region40
    $region39: #{tpu_custom_call.1} parent=5 // pred_region
      %s452 = ssub.s32 %s9, 2
      // Predicated region
      $region41: #{tpu_custom_call.1} parent=39 // pred_check
        %p453 = pneg %p106
      $region42: #{tpu_custom_call.1} parent=39 // pred_check_branch
        %455 = sbr.rel (%p453) target = $region44
      $region43: #{tpu_custom_call.1} parent=39 // pred_region
        %p456 = scmp.lt.s32.totalorder %s15, 1
        %s457 = scalar_select %p456, %s15, 1
        %s458 = smul.addr %s457, 5
        %s459 = smul.addr %s458, 8
        %s460 = scalar_lea.vmem %s3, %s459
      $region44: #{tpu_custom_call.1} parent=39 // pred_fallthru
        _
    $region40: #{tpu_custom_call.1} parent=5 // pred_fallthru
      _
  $region6: #{tpu_custom_call.1} parent=0 // loop_footer
    %s13 = sadd.s32 1, %s9
  $region7: #{tpu_custom_call.1} parent=0 // loop_footer_branch
    %8 = sbr.rel target = $region3
  $region8: #{tpu_custom_call.1} parent=0 // loop_exit
    _

</llo_original>
